<compile_context>
chip_gen: v6e
topology: v6e:2x2x1
jax: 0.10.0
libtpu: 0.0.40
codegen_flags: <defaults>
</compile_context>

<pallas_src>
import math

import jax
import jax.numpy as jnp
from jax import lax
from jax.experimental import pallas as pl
from jax.experimental.pallas import tpu as pltpu


_LANES = 512                    # lane-dense last dim (multiple of 128)
_ACC_ROWS = 32                  # accumulator rows = 16 f32 vregs
_TARGET_BLOCK_BYTES = 4 << 20   # ~4 MiB of stored data per input block


def _cdiv(a: int, b: int) -> int:
    return -(-a // b)


def _round_up(x: int, m: int) -> int:
    return ((x + m - 1) // m) * m


def _num_partials() -> int:
    """2 on megacore chips (2 TensorCores per JAX device), else 1."""
    try:
        kind = jax.devices()[0].device_kind.lower()
    except Exception:
        return 1
    return 2 if any(t in kind for t in ("v4", "v5p", "v7", "7x")) else 1


def _make_l1_kernel(total_elems: int, rows_valid: int, tile_rows: int, lanes: int):
    inv_n = 1.0 / float(total_elems)
    fold = _ACC_ROWS

    def kernel(t_ref, w_ref, out_ref, acc_ref):
        o = pl.program_id(0)              # partial ("parallel") axis
        i = pl.program_id(1)              # reduction ("arbitrary") axis
        n_i = pl.num_programs(1)

        @pl.when(i == 0)
        def _():
            acc_ref[...] = jnp.zeros_like(acc_ref)

        # Logical (unclamped) row offset of this grid step; valid = rows of
        # real (in-bounds) data in this block.  Zero-padded rows inside the
        # array contribute 0 and need no masking.
        block_start = (o * n_i + i) * tile_rows
        valid = rows_valid - block_start

        def accumulate(mask_tail):
            diff = jnp.abs(
                w_ref[...].astype(jnp.float32) - t_ref[...].astype(jnp.float32)
            )
            if mask_tail:
                row_ids = lax.broadcasted_iota(jnp.int32, (tile_rows, lanes), 0)
                diff = jnp.where(row_ids < valid, diff, 0.0)
            # (tile_rows, lanes) -> (tile_rows//32, 32, lanes); summing axis 0
            # is a relabeling of the (8,128) vreg tiling, so this is pure VPU
            # elementwise adds into a 16-vreg accumulator each step -- no
            # per-step cross-lane reduce, short dependence chain.
            acc_ref[...] += jnp.sum(
                diff.reshape(tile_rows // fold, fold, lanes), axis=0
            )

        is_full = valid >= tile_rows

        @pl.when(is_full)                       # fast path: all rows real
        def _():
            accumulate(False)

        @pl.when(jnp.logical_not(is_full))      # ragged / fully-OOB block
        def _():
            accumulate(True)

        @pl.when(i == n_i - 1)
        def _():
            # Single cross-lane/sublane reduce per partial.
            out_ref[0, 0] = jnp.sum(acc_ref[...]) * inv_n

    return kernel


def lr_loss(target_img: jax.Array, wrap_img: jax.Array, *,
            block_bytes: int = _TARGET_BLOCK_BYTES,
            num_partials: int | None = None) -> jax.Array:
    """L1 (mean absolute error) loss == F.l1_loss(wrap_img, target_img)."""
    assert target_img.shape == wrap_img.shape
    total = math.prod(target_img.shape)
    assert total > 0

    # NOTE: reshape(-1) is a free bitcast only for contiguous inputs; a
    # transposed view forces XLA to insert a copy upstream of this kernel.
    t_flat = target_img.reshape(-1)
    w_flat = wrap_img.reshape(-1)

    itemsize = max(jnp.dtype(target_img.dtype).itemsize,
                   jnp.dtype(wrap_img.dtype).itemsize)
    target_rows = max(
        _ACC_ROWS,
        (block_bytes // (_LANES * itemsize)) // _ACC_ROWS * _ACC_ROWS,
    )

    rows_needed = _cdiv(total, _LANES)
    if rows_needed >= target_rows:
        # Large input: fixed-size streamed blocks; ragged tail masked in-kernel.
        tile_rows = target_rows
        rows = rows_needed
    else:
        # Small input (< one block): single block, pad rows up to the
        # accumulator granularity (cheap: whole array is < block_bytes).
        tile_rows = _round_up(rows_needed, _ACC_ROWS)
        rows = tile_rows

    padded_total = rows * _LANES
    if padded_total != total:
        # Only hit when total % 512 != 0 (<=511 zeros) or for tiny inputs.
        pad = padded_total - total
        t_flat = jnp.pad(t_flat, (0, pad))
        w_flat = jnp.pad(w_flat, (0, pad))
    t2 = t_flat.reshape(rows, _LANES)
    w2 = w_flat.reshape(rows, _LANES)

    if num_partials is None:
        num_partials = _num_partials()
    blocks_total = _cdiv(rows, tile_rows)
    inner = _cdiv(blocks_total, num_partials)

    if num_partials * inner > blocks_total:
        def in_map(o, i):
            # Clamp so the DMA never targets a block past the array; the
            # kernel masks the logically-out-of-range contribution to zero.
            return (jnp.minimum(o * inner + i, blocks_total - 1), 0)
    else:
        def in_map(o, i):
            return (o * inner + i, 0)

    cost = pl.CostEstimate(
        flops=3 * total,                       # sub + abs + accumulate add
        transcendentals=0,
        bytes_accessed=2 * total * itemsize + num_partials * 4,
    )

    partials = pl.pallas_call(
        _make_l1_kernel(total, rows, tile_rows, _LANES),
        out_shape=jax.ShapeDtypeStruct((num_partials, 1), jnp.float32),
        grid_spec=pltpu.PrefetchScalarGridSpec(
            num_scalar_prefetch=0,
            grid=(num_partials, inner),
            in_specs=[
                pl.BlockSpec((tile_rows, _LANES), in_map),
                pl.BlockSpec((tile_rows, _LANES), in_map),
            ],
            out_specs=pl.BlockSpec(
                (1, 1), lambda o, i: (o, 0), memory_space=pltpu.SMEM
            ),
            scratch_shapes=[pltpu.VMEM((_ACC_ROWS, _LANES), jnp.float32)],
        ),
        compiler_params=pltpu.CompilerParams(
            dimension_semantics=("parallel", "arbitrary"),
            vmem_limit_bytes=40 * 1024 * 1024,
        ),
        cost_estimate=cost,
    )(t2, w2)

    # One scalar add in plain JAX combines the per-core partials.
    return jnp.sum(partials)


if __name__ == "__main__":
    key = jax.random.PRNGKey(0)
    k1, k2 = jax.random.split(key)

    # Primary check: shapes implied by the module (B, C, H, W).
    B, C, H, W = 2, 4, 16, 16
    target_img = jax.random.normal(k1, (B, C, H, W), dtype=jnp.float32)
    wrap_img = jax.random.normal(k2, (B, C, H, W), dtype=jnp.float32)

    loss = lr_loss(target_img, wrap_img)
    jax.block_until_ready(loss)

    ref = jnp.mean(jnp.abs(wrap_img - target_img))
    assert jnp.allclose(loss, ref, rtol=1e-5, atol=1e-6), (loss, ref)

    # Extra check: exercises the ragged-tail masking, block-index clamping and
    # multi-partial paths using a small block-size override (still small data).
    t_b = jax.random.normal(k1, (2, 4, 25, 512), dtype=jnp.float32)
    w_b = jax.random.normal(k2, (2, 4, 25, 512), dtype=jnp.float32)
    loss_b = lr_loss(t_b, w_b, block_bytes=64 * 1024, num_partials=2)
    jax.block_until_ready(loss_b)
    ref_b = jnp.mean(jnp.abs(w_b - t_b))
    assert jnp.allclose(loss_b, ref_b, rtol=1e-5, atol=1e-6), (loss_b, ref_b)

    print("KERNEL_OK")
</pallas_src>

<mosaic_0001>
module attributes {stable_mosaic.version = 11 : i64} {
  func.func @kernel(%arg0: i32, %arg1: i32, %arg2: memref<32x512xf32, #tpu.memory_space<vmem>>, %arg3: memref<32x512xf32, #tpu.memory_space<vmem>>, %arg4: memref<1x1xf32, #tpu.memory_space<smem>>, %arg5: memref<32x512xf32, #tpu.memory_space<vmem>>) attributes {dimension_semantics = [#tpu.dimension_semantics<parallel>, #tpu.dimension_semantics<arbitrary>], iteration_bounds = array<i64: 1, 1>, scalar_prefetch = 0 : i64, scratch_operands = 1 : i64, tpu.core_type = #tpu.core_type<tc>, window_params = [{transform_indices = @transform_0, window_bounds = array<i64: 32, 512>}, {transform_indices = @transform_1, window_bounds = array<i64: 32, 512>}, {transform_indices = @transform_2, window_bounds = array<i64: 1, 1>}]} {
    %c0_i32 = arith.constant 0 : i32
    %0 = arith.cmpi eq, %arg1, %c0_i32 : i32
    %1 = arith.extui %0 : i1 to i32
    %c0_i32_0 = arith.constant 0 : i32
    %2 = arith.cmpi ne, %1, %c0_i32_0 : i32
    scf.if %2 {
      %cst = arith.constant 0.000000e+00 : f32
      %16 = vector.broadcast %cst : f32 to vector<32x512xf32>
      %c0 = arith.constant 0 : index
      %c0_7 = arith.constant 0 : index
      %17 = vector.load %arg5[%c0, %c0_7] : memref<32x512xf32, #tpu.memory_space<vmem>>, vector<32x512xf32>
      tpu.vector_store %arg5[%c0, %c0_7], %16 {strides = array<i32>} : memref<32x512xf32, #tpu.memory_space<vmem>>, vector<32x512xf32>,
    } else {
    }
    %c1_i32 = arith.constant 1 : i32
    %3 = arith.muli %arg0, %c1_i32 : i32
    %4 = arith.addi %3, %arg1 : i32
    %c32_i32 = arith.constant 32 : i32
    %5 = arith.muli %4, %c32_i32 : i32
    %c32_i32_1 = arith.constant 32 : i32
    %6 = arith.subi %c32_i32_1, %5 : i32
    %c32_i32_2 = arith.constant 32 : i32
    %7 = arith.cmpi sge, %6, %c32_i32_2 : i32
    %8 = arith.extui %7 : i1 to i32
    %c0_i32_3 = arith.constant 0 : i32
    %9 = arith.cmpi ne, %8, %c0_i32_3 : i32
    scf.if %9 {
      %c0 = arith.constant 0 : index
      %c0_7 = arith.constant 0 : index
      %16 = vector.load %arg3[%c0, %c0_7] : memref<32x512xf32, #tpu.memory_space<vmem>>, vector<32x512xf32>
      %c0_8 = arith.constant 0 : index
      %c0_9 = arith.constant 0 : index
      %17 = vector.load %arg2[%c0_8, %c0_9] : memref<32x512xf32, #tpu.memory_space<vmem>>, vector<32x512xf32>
      %18 = arith.subf %16, %17 : vector<32x512xf32>
      %19 = math.absf %18 : vector<32x512xf32>
      %c0_10 = arith.constant 0 : index
      %c0_11 = arith.constant 0 : index
      %20 = vector.load %arg5[%c0_10, %c0_11] : memref<32x512xf32, #tpu.memory_space<vmem>>, vector<32x512xf32>
      %21 = vector.shape_cast %19 : vector<32x512xf32> to vector<1x32x512xf32>
      %cst = arith.constant dense<0.000000e+00> : vector<32x512xf32>
      %22 = vector.multi_reduction <add>, %21, %cst [0] : vector<1x32x512xf32> to vector<32x512xf32>
      %23 = arith.addf %20, %22 : vector<32x512xf32>
      %c0_12 = arith.constant 0 : index
      %c0_13 = arith.constant 0 : index
      %24 = vector.load %arg5[%c0_12, %c0_13] : memref<32x512xf32, #tpu.memory_space<vmem>>, vector<32x512xf32>
      tpu.vector_store %arg5[%c0_12, %c0_13], %23 {strides = array<i32>} : memref<32x512xf32, #tpu.memory_space<vmem>>, vector<32x512xf32>,
    } else {
    }
    %true = arith.constant true
    %10 = arith.xori %7, %true : i1
    %11 = arith.extui %10 : i1 to i32
    %c0_i32_4 = arith.constant 0 : i32
    %12 = arith.cmpi ne, %11, %c0_i32_4 : i32
    scf.if %12 {
      %c0 = arith.constant 0 : index
      %c0_7 = arith.constant 0 : index
      %16 = vector.load %arg3[%c0, %c0_7] : memref<32x512xf32, #tpu.memory_space<vmem>>, vector<32x512xf32>
      %c0_8 = arith.constant 0 : index
      %c0_9 = arith.constant 0 : index
      %17 = vector.load %arg2[%c0_8, %c0_9] : memref<32x512xf32, #tpu.memory_space<vmem>>, vector<32x512xf32>
      %18 = arith.subf %16, %17 : vector<32x512xf32>
      %19 = math.absf %18 : vector<32x512xf32>
      %20 = tpu.iota {dimensions = array<i32: 0>} : vector<32x512xi32>
      %21 = vector.broadcast %6 : i32 to vector<32x512xi32>
      %22 = arith.cmpi slt, %20, %21 : vector<32x512xi32>
      %cst = arith.constant 0.000000e+00 : f32
      %23 = vector.broadcast %cst : f32 to vector<32x512xf32>
      %24 = arith.select %22, %19, %23 : vector<32x512xi1>, vector<32x512xf32>
      %c0_10 = arith.constant 0 : index
      %c0_11 = arith.constant 0 : index
      %25 = vector.load %arg5[%c0_10, %c0_11] : memref<32x512xf32, #tpu.memory_space<vmem>>, vector<32x512xf32>
      %26 = vector.shape_cast %24 : vector<32x512xf32> to vector<1x32x512xf32>
      %cst_12 = arith.constant dense<0.000000e+00> : vector<32x512xf32>
      %27 = vector.multi_reduction <add>, %26, %cst_12 [0] : vector<1x32x512xf32> to vector<32x512xf32>
      %28 = arith.addf %25, %27 : vector<32x512xf32>
      %c0_13 = arith.constant 0 : index
      %c0_14 = arith.constant 0 : index
      %29 = vector.load %arg5[%c0_13, %c0_14] : memref<32x512xf32, #tpu.memory_space<vmem>>, vector<32x512xf32>
      tpu.vector_store %arg5[%c0_13, %c0_14], %28 {strides = array<i32>} : memref<32x512xf32, #tpu.memory_space<vmem>>, vector<32x512xf32>,
    } else {
    }
    %c0_i32_5 = arith.constant 0 : i32
    %13 = arith.cmpi eq, %arg1, %c0_i32_5 : i32
    %14 = arith.extui %13 : i1 to i32
    %c0_i32_6 = arith.constant 0 : i32
    %15 = arith.cmpi ne, %14, %c0_i32_6 : i32
    scf.if %15 {
      %c0 = arith.constant 0 : index
      %c0_7 = arith.constant 0 : index
      %16 = vector.load %arg5[%c0, %c0_7] : memref<32x512xf32, #tpu.memory_space<vmem>>, vector<32x512xf32>
      %17 = vector.shape_cast %16 : vector<32x512xf32> to vector<1x32x512xf32>
      %cst = arith.constant dense<0.000000e+00> : vector<1xf32>
      %18 = vector.multi_reduction <add>, %17, %cst [1, 2] : vector<1x32x512xf32> to vector<1xf32>
      %19 = vector.shape_cast %18 : vector<1xf32> to vector<1x1x1xf32>
      %20 = vector.extract %19[0, 0, 0] : f32 from vector<1x1x1xf32>
      %cst_8 = arith.constant 4.8828125E-4 : f32
      %21 = arith.mulf %20, %cst_8 : f32
      %c0_9 = arith.constant 0 : index
      %c0_10 = arith.constant 0 : index
      %22 = memref.load %arg4[%c0_9, %c0_10] : memref<1x1xf32, #tpu.memory_space<smem>>
      memref.store %21, %arg4[%c0_9, %c0_10] : memref<1x1xf32, #tpu.memory_space<smem>>
    } else {
    }
    return
  }
  func.func @transform_0(%arg0: i32, %arg1: i32) -> (i32, i32) {
    %c1_i32 = arith.constant 1 : i32
    %0 = arith.muli %arg0, %c1_i32 : i32
    %1 = arith.addi %0, %arg1 : i32
    %c0_i32 = arith.constant 0 : i32
    %c0_i32_0 = arith.constant 0 : i32
    return %1, %c0_i32 : i32, i32
  }
  func.func @transform_1(%arg0: i32, %arg1: i32) -> (i32, i32) {
    %c1_i32 = arith.constant 1 : i32
    %0 = arith.muli %arg0, %c1_i32 : i32
    %1 = arith.addi %0, %arg1 : i32
    %c0_i32 = arith.constant 0 : i32
    %c0_i32_0 = arith.constant 0 : i32
    return %1, %c0_i32 : i32, i32
  }
  func.func @transform_2(%arg0: i32, %arg1: i32) -> (i32, i32) {
    %c0_i32 = arith.constant 0 : i32
    %c0_i32_0 = arith.constant 0 : i32
    return %arg0, %c0_i32 : i32, i32
  }
}

</mosaic_0001>

<llo_original>
// kernel: tpu_custom_call.1
$region0: #{tpu_custom_call.1}
  #allocation0 [shape = 'u32[]', space=smem, size = 0x4, offset = 0x4, fixed_abs, tag = 'smem constant byte address 0x4 - core index']
  #allocation1 [shape = 'u32[144,128]{1,0:T(1,128)}', space=vmem, size = 0x12000, scoped, tag = 'internal scratch']
  #allocation2 [shape = 'f32[32,512]{1,0:T(8,128)}', space=vmem, size = 0x10000, scoped, tag = 'scratch operand']
  %s0 = inlined_call_operand.hbm [shape: f32[32,512], index: 0, kind: input, shape index: {}]
  %s1 = inlined_call_operand.hbm [shape: f32[32,512], index: 1, kind: input, shape index: {}]
  %s2 = inlined_call_operand.hbm [shape: f32[1,1], index: 2, kind: output, shape index: {}]
  %s3 = sld [smem:[#allocation0]]
  $region42: #{tpu_custom_call.1} parent=0
    _
  %s5 = ssub.s32 1, %s3
  %s6 = scalar_select 0, %s5, %s3
  $region1: #{tpu_custom_call.1} parent=0
    #allocation3 [shape = 'u8[65536]{0}', space=vmem, size = 0x10000, scoped, tag = 'input window, operand 0, single buffered']
    #allocation4 [shape = 's32[1]{0}', space=sflag, size = 0x4, scoped, tag = 'scoped memory for tpu_custom_call.1']
    #allocation5 [shape = 's32[1]{0}', space=sflag, size = 0x4, scoped, tag = 'scoped memory for tpu_custom_call.1']
    #allocation6 [shape = 'u8[65536]{0}', space=vmem, size = 0x10000, scoped, tag = 'input window, operand 1, single buffered']
    #allocation7 [shape = 's32[1]{0}', space=sflag, size = 0x4, scoped, tag = 'scoped memory for tpu_custom_call.1']
    #allocation8 [shape = 'u8[512]{0}', space=smem, size = 0x200, scoped, tag = 'output window, operand 0, single buffered']
    %7 = vsyncpa [#allocation4], 0
    %8 = vsyncpa [#allocation7], 0
    %9 = vsyncpa [#allocation5], 0
    // Predicated region
    $region2: #{tpu_custom_call.1} parent=1 // pred_check
      _
    $region3: #{tpu_custom_call.1} parent=1 // pred_check_branch
      %11 = sbr.rel (0) target = $region5
    $region4: #{tpu_custom_call.1} parent=1 // pred_region
      %s12 = sadd.s32 0, 0
      %s13 = smul.u32 4, %s12
      %s15 = ssub.s32 2048, 2048
      %16 = vsyncadd [#allocation4], %s15
      %s17 = smul.addr %s13, 4
      %s18 = smul.addr %s17, 128
      %s19 = scalar_lea.hbm %s0, %s18
      %s20 = sshll.u32 [#allocation3], 4
      %s21 = int_to_ptr.vmem [resolvable:$true] %s20
      %26 = dma.hbm_to_vmem [thread:$0]  %s19, 2048, %s21, [#allocation4], 512, 512, 32
    $region5: #{tpu_custom_call.1} parent=1 // pred_fallthru
      _
    // Predicated region
    $region6: #{tpu_custom_call.1} parent=1 // pred_check
      _
    $region7: #{tpu_custom_call.1} parent=1 // pred_check_branch
      %28 = sbr.rel (0) target = $region9
    $region8: #{tpu_custom_call.1} parent=1 // pred_region
      %s29 = sadd.s32 0, 0
      %s30 = smul.u32 4, %s29
      %s32 = ssub.s32 2048, 2048
      %33 = vsyncadd [#allocation7], %s32
      %s34 = smul.addr %s30, 4
      %s35 = smul.addr %s34, 128
      %s36 = scalar_lea.hbm %s1, %s35
      %s37 = sshll.u32 [#allocation6], 4
      %s38 = int_to_ptr.vmem [resolvable:$true] %s37
      %43 = dma.hbm_to_vmem [thread:$0]  %s36, 2048, %s38, [#allocation7], 512, 512, 32
    $region9: #{tpu_custom_call.1} parent=1 // pred_fallthru
      _
    // Predicated region
    $region10: #{tpu_custom_call.1} parent=1 // pred_check
      _
    $region11: #{tpu_custom_call.1} parent=1 // pred_check_branch
      %45 = sbr.rel (0) target = $region13
    $region12: #{tpu_custom_call.1} parent=1 // pred_region
      %46 = dma.done [#allocation4], 2048
    $region13: #{tpu_custom_call.1} parent=1 // pred_fallthru
      _
    // Predicated region
    $region14: #{tpu_custom_call.1} parent=1 // pred_check
      _
    $region15: #{tpu_custom_call.1} parent=1 // pred_check_branch
      %48 = sbr.rel (0) target = $region17
    $region16: #{tpu_custom_call.1} parent=1 // pred_region
      %49 = dma.done [#allocation7], 2048
    $region17: #{tpu_custom_call.1} parent=1 // pred_fallthru
      _
    %s50 = sadd.s32 0, 0
    %s51 = smul.u32 4, %s50
    %s52 = sadd.s32 0, 0
    %s53 = smul.u32 4, %s52
    %p54 = scmp.eq.s32.totalorder 0, 0
    // Predicated region
    $region18: #{tpu_custom_call.1} parent=1 // pred_check
      %p55 = pneg %p54
    $region19: #{tpu_custom_call.1} parent=1 // pred_check_branch
      %57 = sbr.rel (%p55) target = $region21
    $region20: #{tpu_custom_call.1} parent=1 // pred_region
      %58 = vst [vmem:[#allocation2] sm:$0xff] 0.0
      %59 = vst [vmem:[#allocation2 + $0x8] sm:$0xff] 0.0
      %60 = vst [vmem:[#allocation2 + $0x10] sm:$0xff] 0.0
      %61 = vst [vmem:[#allocation2 + $0x18] sm:$0xff] 0.0
      %62 = vst [vmem:[#allocation2 + $0x20] sm:$0xff] 0.0
      %63 = vst [vmem:[#allocation2 + $0x28] sm:$0xff] 0.0
      %64 = vst [vmem:[#allocation2 + $0x30] sm:$0xff] 0.0
      %65 = vst [vmem:[#allocation2 + $0x38] sm:$0xff] 0.0
      %66 = vst [vmem:[#allocation2 + $0x40] sm:$0xff] 0.0
      %67 = vst [vmem:[#allocation2 + $0x48] sm:$0xff] 0.0
      %68 = vst [vmem:[#allocation2 + $0x50] sm:$0xff] 0.0
      %69 = vst [vmem:[#allocation2 + $0x58] sm:$0xff] 0.0
      %70 = vst [vmem:[#allocation2 + $0x60] sm:$0xff] 0.0
      %71 = vst [vmem:[#allocation2 + $0x68] sm:$0xff] 0.0
      %72 = vst [vmem:[#allocation2 + $0x70] sm:$0xff] 0.0
      %73 = vst [vmem:[#allocation2 + $0x78] sm:$0xff] 0.0
    $region21: #{tpu_custom_call.1} parent=1 // pred_fallthru
      _
    %s74 = sadd.s32 0, 0
    %s75 = smul.u32 %s74, 32
    %s76 = ssub.s32 32, %s75
    %p77 = scmp.ge.s32.totalorder %s76, 32
    // Predicated region
    $region22: #{tpu_custom_call.1} parent=1 // pred_check
      %p78 = pneg %p77
    $region23: #{tpu_custom_call.1} parent=1 // pred_check_branch
      %80 = sbr.rel (%p78) target = $region25
    $region24: #{tpu_custom_call.1} parent=1 // pred_region
      %v81 = vld [vmem:[#allocation6] sm:$0xff]
      %v82 = vld [vmem:[#allocation6 + $0x8] sm:$0xff]
      %v83 = vld [vmem:[#allocation6 + $0x10] sm:$0xff]
      %v84 = vld [vmem:[#allocation6 + $0x18] sm:$0xff]
      %v85 = vld [vmem:[#allocation6 + $0x20] sm:$0xff]
      %v86 = vld [vmem:[#allocation6 + $0x28] sm:$0xff]
      %v87 = vld [vmem:[#allocation6 + $0x30] sm:$0xff]
      %v88 = vld [vmem:[#allocation6 + $0x38] sm:$0xff]
      %v89 = vld [vmem:[#allocation6 + $0x40] sm:$0xff]
      %v90 = vld [vmem:[#allocation6 + $0x48] sm:$0xff]
      %v91 = vld [vmem:[#allocation6 + $0x50] sm:$0xff]
      %v92 = vld [vmem:[#allocation6 + $0x58] sm:$0xff]
      %v93 = vld [vmem:[#allocation6 + $0x60] sm:$0xff]
      %v94 = vld [vmem:[#allocation6 + $0x68] sm:$0xff]
      %v95 = vld [vmem:[#allocation6 + $0x70] sm:$0xff]
      %v96 = vld [vmem:[#allocation6 + $0x78] sm:$0xff]
      %v97 = vld [vmem:[#allocation3] sm:$0xff]
      %v98 = vld [vmem:[#allocation3 + $0x8] sm:$0xff]
      %v99 = vld [vmem:[#allocation3 + $0x10] sm:$0xff]
      %v100 = vld [vmem:[#allocation3 + $0x18] sm:$0xff]
      %v101 = vld [vmem:[#allocation3 + $0x20] sm:$0xff]
      %v102 = vld [vmem:[#allocation3 + $0x28] sm:$0xff]
      %v103 = vld [vmem:[#allocation3 + $0x30] sm:$0xff]
      %v104 = vld [vmem:[#allocation3 + $0x38] sm:$0xff]
      %v105 = vld [vmem:[#allocation3 + $0x40] sm:$0xff]
      %v106 = vld [vmem:[#allocation3 + $0x48] sm:$0xff]
      %v107 = vld [vmem:[#allocation3 + $0x50] sm:$0xff]
      %v108 = vld [vmem:[#allocation3 + $0x58] sm:$0xff]
      %v109 = vld [vmem:[#allocation3 + $0x60] sm:$0xff]
      %v110 = vld [vmem:[#allocation3 + $0x68] sm:$0xff]
      %v111 = vld [vmem:[#allocation3 + $0x70] sm:$0xff]
      %v112 = vld [vmem:[#allocation3 + $0x78] sm:$0xff]
      %v113 = vsub.f32 %v81, %v97
      %v114 = vsub.f32 %v82, %v98
      %v115 = vsub.f32 %v83, %v99
      %v116 = vsub.f32 %v84, %v100
      %v117 = vsub.f32 %v85, %v101
      %v118 = vsub.f32 %v86, %v102
      %v119 = vsub.f32 %v87, %v103
      %v120 = vsub.f32 %v88, %v104
      %v121 = vsub.f32 %v89, %v105
      %v122 = vsub.f32 %v90, %v106
      %v123 = vsub.f32 %v91, %v107
      %v124 = vsub.f32 %v92, %v108
      %v125 = vsub.f32 %v93, %v109
      %v126 = vsub.f32 %v94, %v110
      %v127 = vsub.f32 %v95, %v111
      %v128 = vsub.f32 %v96, %v112
      %v129 = vand.u32 2147483647, %v113
      %v130 = vand.u32 2147483647, %v114
      %v131 = vand.u32 2147483647, %v115
      %v132 = vand.u32 2147483647, %v116
      %v133 = vand.u32 2147483647, %v117
      %v134 = vand.u32 2147483647, %v118
      %v135 = vand.u32 2147483647, %v119
      %v136 = vand.u32 2147483647, %v120
      %v137 = vand.u32 2147483647, %v121
      %v138 = vand.u32 2147483647, %v122
      %v139 = vand.u32 2147483647, %v123
      %v140 = vand.u32 2147483647, %v124
      %v141 = vand.u32 2147483647, %v125
      %v142 = vand.u32 2147483647, %v126
      %v143 = vand.u32 2147483647, %v127
      %v144 = vand.u32 2147483647, %v128
      %v145 = vld [vmem:[#allocation2] sm:$0xff]
      %v146 = vld [vmem:[#allocation2 + $0x8] sm:$0xff]
      %v147 = vld [vmem:[#allocation2 + $0x10] sm:$0xff]
      %v148 = vld [vmem:[#allocation2 + $0x18] sm:$0xff]
      %v149 = vld [vmem:[#allocation2 + $0x20] sm:$0xff]
      %v150 = vld [vmem:[#allocation2 + $0x28] sm:$0xff]
      %v151 = vld [vmem:[#allocation2 + $0x30] sm:$0xff]
      %v152 = vld [vmem:[#allocation2 + $0x38] sm:$0xff]
      %v153 = vld [vmem:[#allocation2 + $0x40] sm:$0xff]
      %v154 = vld [vmem:[#allocation2 + $0x48] sm:$0xff]
      %v155 = vld [vmem:[#allocation2 + $0x50] sm:$0xff]
      %v156 = vld [vmem:[#allocation2 + $0x58] sm:$0xff]
      %v157 = vld [vmem:[#allocation2 + $0x60] sm:$0xff]
      %v158 = vld [vmem:[#allocation2 + $0x68] sm:$0xff]
      %v159 = vld [vmem:[#allocation2 + $0x70] sm:$0xff]
      %v160 = vld [vmem:[#allocation2 + $0x78] sm:$0xff]
      %v161 = vadd.f32 %v129, 0.0
      %v162 = vadd.f32 %v130, 0.0
      %v163 = vadd.f32 %v131, 0.0
      %v164 = vadd.f32 %v132, 0.0
      %v165 = vadd.f32 %v133, 0.0
      %v166 = vadd.f32 %v134, 0.0
      %v167 = vadd.f32 %v135, 0.0
      %v168 = vadd.f32 %v136, 0.0
      %v169 = vadd.f32 %v137, 0.0
      %v170 = vadd.f32 %v138, 0.0
      %v171 = vadd.f32 %v139, 0.0
      %v172 = vadd.f32 %v140, 0.0
      %v173 = vadd.f32 %v141, 0.0
      %v174 = vadd.f32 %v142, 0.0
      %v175 = vadd.f32 %v143, 0.0
      %v176 = vadd.f32 %v144, 0.0
      %v177 = vadd.f32 %v145, %v161
      %v178 = vadd.f32 %v146, %v162
      %v179 = vadd.f32 %v147, %v163
      %v180 = vadd.f32 %v148, %v164
      %v181 = vadd.f32 %v149, %v165
      %v182 = vadd.f32 %v150, %v166
      %v183 = vadd.f32 %v151, %v167
      %v184 = vadd.f32 %v152, %v168
      %v185 = vadd.f32 %v153, %v169
      %v186 = vadd.f32 %v154, %v170
      %v187 = vadd.f32 %v155, %v171
      %v188 = vadd.f32 %v156, %v172
      %v189 = vadd.f32 %v157, %v173
      %v190 = vadd.f32 %v158, %v174
      %v191 = vadd.f32 %v159, %v175
      %v192 = vadd.f32 %v160, %v176
      %193 = vst [vmem:[#allocation2] sm:$0xff] %v177
      %194 = vst [vmem:[#allocation2 + $0x8] sm:$0xff] %v178
      %195 = vst [vmem:[#allocation2 + $0x10] sm:$0xff] %v179
      %196 = vst [vmem:[#allocation2 + $0x18] sm:$0xff] %v180
      %197 = vst [vmem:[#allocation2 + $0x20] sm:$0xff] %v181
      %198 = vst [vmem:[#allocation2 + $0x28] sm:$0xff] %v182
      %199 = vst [vmem:[#allocation2 + $0x30] sm:$0xff] %v183
      %200 = vst [vmem:[#allocation2 + $0x38] sm:$0xff] %v184
      %201 = vst [vmem:[#allocation2 + $0x40] sm:$0xff] %v185
      %202 = vst [vmem:[#allocation2 + $0x48] sm:$0xff] %v186
      %203 = vst [vmem:[#allocation2 + $0x50] sm:$0xff] %v187
      %204 = vst [vmem:[#allocation2 + $0x58] sm:$0xff] %v188
      %205 = vst [vmem:[#allocation2 + $0x60] sm:$0xff] %v189
      %206 = vst [vmem:[#allocation2 + $0x68] sm:$0xff] %v190
      %207 = vst [vmem:[#allocation2 + $0x70] sm:$0xff] %v191
      %208 = vst [vmem:[#allocation2 + $0x78] sm:$0xff] %v192
    $region25: #{tpu_custom_call.1} parent=1 // pred_fallthru
      _
    %p209 = scmp.lt.s32.totalorder %s76, 32
    // Predicated region
    $region26: #{tpu_custom_call.1} parent=1 // pred_check
      %p210 = pneg %p209
    $region27: #{tpu_custom_call.1} parent=1 // pred_check_branch
      %212 = sbr.rel (%p210) target = $region29
    $region28: #{tpu_custom_call.1} parent=1 // pred_region
      %v213 = vld [vmem:[#allocation6] sm:$0xff]
      %v214 = vld [vmem:[#allocation6 + $0x8] sm:$0xff]
      %v215 = vld [vmem:[#allocation6 + $0x10] sm:$0xff]
      %v216 = vld [vmem:[#allocation6 + $0x18] sm:$0xff]
      %v217 = vld [vmem:[#allocation6 + $0x20] sm:$0xff]
      %v218 = vld [vmem:[#allocation6 + $0x28] sm:$0xff]
      %v219 = vld [vmem:[#allocation6 + $0x30] sm:$0xff]
      %v220 = vld [vmem:[#allocation6 + $0x38] sm:$0xff]
      %v221 = vld [vmem:[#allocation6 + $0x40] sm:$0xff]
      %v222 = vld [vmem:[#allocation6 + $0x48] sm:$0xff]
      %v223 = vld [vmem:[#allocation6 + $0x50] sm:$0xff]
      %v224 = vld [vmem:[#allocation6 + $0x58] sm:$0xff]
      %v225 = vld [vmem:[#allocation6 + $0x60] sm:$0xff]
      %v226 = vld [vmem:[#allocation6 + $0x68] sm:$0xff]
      %v227 = vld [vmem:[#allocation6 + $0x70] sm:$0xff]
      %v228 = vld [vmem:[#allocation6 + $0x78] sm:$0xff]
      %v229 = vld [vmem:[#allocation3] sm:$0xff]
      %v230 = vld [vmem:[#allocation3 + $0x8] sm:$0xff]
      %v231 = vld [vmem:[#allocation3 + $0x10] sm:$0xff]
      %v232 = vld [vmem:[#allocation3 + $0x18] sm:$0xff]
      %v233 = vld [vmem:[#allocation3 + $0x20] sm:$0xff]
      %v234 = vld [vmem:[#allocation3 + $0x28] sm:$0xff]
      %v235 = vld [vmem:[#allocation3 + $0x30] sm:$0xff]
      %v236 = vld [vmem:[#allocation3 + $0x38] sm:$0xff]
      %v237 = vld [vmem:[#allocation3 + $0x40] sm:$0xff]
      %v238 = vld [vmem:[#allocation3 + $0x48] sm:$0xff]
      %v239 = vld [vmem:[#allocation3 + $0x50] sm:$0xff]
      %v240 = vld [vmem:[#allocation3 + $0x58] sm:$0xff]
      %v241 = vld [vmem:[#allocation3 + $0x60] sm:$0xff]
      %v242 = vld [vmem:[#allocation3 + $0x68] sm:$0xff]
      %v243 = vld [vmem:[#allocation3 + $0x70] sm:$0xff]
      %v244 = vld [vmem:[#allocation3 + $0x78] sm:$0xff]
      %v245 = vsub.f32 %v213, %v229
      %v246 = vsub.f32 %v214, %v230
      %v247 = vsub.f32 %v215, %v231
      %v248 = vsub.f32 %v216, %v232
      %v249 = vsub.f32 %v217, %v233
      %v250 = vsub.f32 %v218, %v234
      %v251 = vsub.f32 %v219, %v235
      %v252 = vsub.f32 %v220, %v236
      %v253 = vsub.f32 %v221, %v237
      %v254 = vsub.f32 %v222, %v238
      %v255 = vsub.f32 %v223, %v239
      %v256 = vsub.f32 %v224, %v240
      %v257 = vsub.f32 %v225, %v241
      %v258 = vsub.f32 %v226, %v242
      %v259 = vsub.f32 %v227, %v243
      %v260 = vsub.f32 %v228, %v244
      %v261 = vand.u32 2147483647, %v245
      %v262 = vand.u32 2147483647, %v246
      %v263 = vand.u32 2147483647, %v247
      %v264 = vand.u32 2147483647, %v248
      %v265 = vand.u32 2147483647, %v249
      %v266 = vand.u32 2147483647, %v250
      %v267 = vand.u32 2147483647, %v251
      %v268 = vand.u32 2147483647, %v252
      %v269 = vand.u32 2147483647, %v253
      %v270 = vand.u32 2147483647, %v254
      %v271 = vand.u32 2147483647, %v255
      %v272 = vand.u32 2147483647, %v256
      %v273 = vand.u32 2147483647, %v257
      %v274 = vand.u32 2147483647, %v258
      %v275 = vand.u32 2147483647, %v259
      %v276 = vand.u32 2147483647, %v260
      %v277 = vlaneseq
      %v278 = vshrl.u32 %v277, 7
      %v279 = vadd.s32 %v278, 8
      %v280 = vadd.s32 %v278, 16
      %v281 = vadd.s32 %v278, 24
      %v282 = vstv %s76
      %vm283 = vcmp.lt.s32.totalorder %v278, %v282
      %vm284 = vcmp.lt.s32.totalorder %v279, %v282
      %vm285 = vcmp.lt.s32.totalorder %v280, %v282
      %vm286 = vcmp.lt.s32.totalorder %v281, %v282
      %v287 = vsel %vm283, %v261, 0.0
      %v288 = vsel %vm283, %v262, 0.0
      %v289 = vsel %vm283, %v263, 0.0
      %v290 = vsel %vm283, %v264, 0.0
      %v291 = vsel %vm284, %v265, 0.0
      %v292 = vsel %vm284, %v266, 0.0
      %v293 = vsel %vm284, %v267, 0.0
      %v294 = vsel %vm284, %v268, 0.0
      %v295 = vsel %vm285, %v269, 0.0
      %v296 = vsel %vm285, %v270, 0.0
      %v297 = vsel %vm285, %v271, 0.0
      %v298 = vsel %vm285, %v272, 0.0
      %v299 = vsel %vm286, %v273, 0.0
      %v300 = vsel %vm286, %v274, 0.0
      %v301 = vsel %vm286, %v275, 0.0
      %v302 = vsel %vm286, %v276, 0.0
      %v303 = vld [vmem:[#allocation2] sm:$0xff]
      %v304 = vld [vmem:[#allocation2 + $0x8] sm:$0xff]
      %v305 = vld [vmem:[#allocation2 + $0x10] sm:$0xff]
      %v306 = vld [vmem:[#allocation2 + $0x18] sm:$0xff]
      %v307 = vld [vmem:[#allocation2 + $0x20] sm:$0xff]
      %v308 = vld [vmem:[#allocation2 + $0x28] sm:$0xff]
      %v309 = vld [vmem:[#allocation2 + $0x30] sm:$0xff]
      %v310 = vld [vmem:[#allocation2 + $0x38] sm:$0xff]
      %v311 = vld [vmem:[#allocation2 + $0x40] sm:$0xff]
      %v312 = vld [vmem:[#allocation2 + $0x48] sm:$0xff]
      %v313 = vld [vmem:[#allocation2 + $0x50] sm:$0xff]
      %v314 = vld [vmem:[#allocation2 + $0x58] sm:$0xff]
      %v315 = vld [vmem:[#allocation2 + $0x60] sm:$0xff]
      %v316 = vld [vmem:[#allocation2 + $0x68] sm:$0xff]
      %v317 = vld [vmem:[#allocation2 + $0x70] sm:$0xff]
      %v318 = vld [vmem:[#allocation2 + $0x78] sm:$0xff]
      %v319 = vadd.f32 %v287, 0.0
      %v320 = vadd.f32 %v288, 0.0
      %v321 = vadd.f32 %v289, 0.0
      %v322 = vadd.f32 %v290, 0.0
      %v323 = vadd.f32 %v291, 0.0
      %v324 = vadd.f32 %v292, 0.0
      %v325 = vadd.f32 %v293, 0.0
      %v326 = vadd.f32 %v294, 0.0
      %v327 = vadd.f32 %v295, 0.0
      %v328 = vadd.f32 %v296, 0.0
      %v329 = vadd.f32 %v297, 0.0
      %v330 = vadd.f32 %v298, 0.0
      %v331 = vadd.f32 %v299, 0.0
      %v332 = vadd.f32 %v300, 0.0
      %v333 = vadd.f32 %v301, 0.0
      %v334 = vadd.f32 %v302, 0.0
      %v335 = vadd.f32 %v303, %v319
      %v336 = vadd.f32 %v304, %v320
      %v337 = vadd.f32 %v305, %v321
      %v338 = vadd.f32 %v306, %v322
      %v339 = vadd.f32 %v307, %v323
      %v340 = vadd.f32 %v308, %v324
      %v341 = vadd.f32 %v309, %v325
      %v342 = vadd.f32 %v310, %v326
      %v343 = vadd.f32 %v311, %v327
      %v344 = vadd.f32 %v312, %v328
      %v345 = vadd.f32 %v313, %v329
      %v346 = vadd.f32 %v314, %v330
      %v347 = vadd.f32 %v315, %v331
      %v348 = vadd.f32 %v316, %v332
      %v349 = vadd.f32 %v317, %v333
      %v350 = vadd.f32 %v318, %v334
      %351 = vst [vmem:[#allocation2] sm:$0xff] %v335
      %352 = vst [vmem:[#allocation2 + $0x8] sm:$0xff] %v336
      %353 = vst [vmem:[#allocation2 + $0x10] sm:$0xff] %v337
      %354 = vst [vmem:[#allocation2 + $0x18] sm:$0xff] %v338
      %355 = vst [vmem:[#allocation2 + $0x20] sm:$0xff] %v339
      %356 = vst [vmem:[#allocation2 + $0x28] sm:$0xff] %v340
      %357 = vst [vmem:[#allocation2 + $0x30] sm:$0xff] %v341
      %358 = vst [vmem:[#allocation2 + $0x38] sm:$0xff] %v342
      %359 = vst [vmem:[#allocation2 + $0x40] sm:$0xff] %v343
      %360 = vst [vmem:[#allocation2 + $0x48] sm:$0xff] %v344
      %361 = vst [vmem:[#allocation2 + $0x50] sm:$0xff] %v345
      %362 = vst [vmem:[#allocation2 + $0x58] sm:$0xff] %v346
      %363 = vst [vmem:[#allocation2 + $0x60] sm:$0xff] %v347
      %364 = vst [vmem:[#allocation2 + $0x68] sm:$0xff] %v348
      %365 = vst [vmem:[#allocation2 + $0x70] sm:$0xff] %v349
      %366 = vst [vmem:[#allocation2 + $0x78] sm:$0xff] %v350
    $region29: #{tpu_custom_call.1} parent=1 // pred_fallthru
      _
    // Predicated region
    $region30: #{tpu_custom_call.1} parent=1 // pred_check
      %p367 = pneg %p54
    $region31: #{tpu_custom_call.1} parent=1 // pred_check_branch
      %369 = sbr.rel (%p367) target = $region33
    $region32: #{tpu_custom_call.1} parent=1 // pred_region
      %v370 = vld [vmem:[#allocation2] sm:$0xff]
      %v371 = vld [vmem:[#allocation2 + $0x8] sm:$0xff]
      %v372 = vld [vmem:[#allocation2 + $0x10] sm:$0xff]
      %v373 = vld [vmem:[#allocation2 + $0x18] sm:$0xff]
      %v374 = vld [vmem:[#allocation2 + $0x20] sm:$0xff]
      %v375 = vld [vmem:[#allocation2 + $0x28] sm:$0xff]
      %v376 = vld [vmem:[#allocation2 + $0x30] sm:$0xff]
      %v377 = vld [vmem:[#allocation2 + $0x38] sm:$0xff]
      %v378 = vld [vmem:[#allocation2 + $0x40] sm:$0xff]
      %v379 = vld [vmem:[#allocation2 + $0x48] sm:$0xff]
      %v380 = vld [vmem:[#allocation2 + $0x50] sm:$0xff]
      %v381 = vld [vmem:[#allocation2 + $0x58] sm:$0xff]
      %v382 = vld [vmem:[#allocation2 + $0x60] sm:$0xff]
      %v383 = vld [vmem:[#allocation2 + $0x68] sm:$0xff]
      %v384 = vld [vmem:[#allocation2 + $0x70] sm:$0xff]
      %v385 = vld [vmem:[#allocation2 + $0x78] sm:$0xff]
      %v386 = vadd.f32 %v370, %v371
      %v387 = vadd.f32 %v386, %v372
      %v388 = vadd.f32 %v387, %v373
      %v389 = vadd.f32 %v388, %v374
      %v390 = vadd.f32 %v389, %v375
      %v391 = vadd.f32 %v390, %v376
      %v392 = vadd.f32 %v391, %v377
      %v393 = vadd.f32 %v392, %v378
      %v394 = vadd.f32 %v393, %v379
      %v395 = vadd.f32 %v394, %v380
      %v396 = vadd.f32 %v395, %v381
      %v397 = vadd.f32 %v396, %v382
      %v398 = vadd.f32 %v397, %v383
      %v399 = vadd.f32 %v398, %v384
      %v400 = vadd.f32 %v399, %v385
      %401 = vadd.xlane.f32.xlu0 %v400
      %v402 = vpop.xlane.xlu0 %401
      %v403 = vrot.slane %v402, 4
      %v404 = vadd.f32 %v402, %v403
      %v405 = vrot.slane %v404, 2
      %v406 = vadd.f32 %v404, %v405
      %v407 = vrot.slane %v406, 1
      %v408 = vadd.f32 %v406, %v407
      %s409 = vtos %v408
      %s410 = smul.f32 %s409, 0.00048828125
      %s411 = scalar_lea.smem [#allocation8], 0
      %412 = sst [smem:[%s411]] %s410
    $region33: #{tpu_custom_call.1} parent=1 // pred_fallthru
      _
    // Predicated region
    $region34: #{tpu_custom_call.1} parent=1 // pred_check
      _
    $region35: #{tpu_custom_call.1} parent=1 // pred_check_branch
      %414 = sbr.rel (0) target = $region37
    $region36: #{tpu_custom_call.1} parent=1 // pred_region
      %s416 = ssub.s32 16, 16
      %417 = vsyncadd [#allocation5], %s416
      %420 = dma.smem_to_hbm [#allocation8], 16, %s2, [#allocation5]
    $region37: #{tpu_custom_call.1} parent=1 // pred_fallthru
      _
    // Predicated region
    $region38: #{tpu_custom_call.1} parent=1 // pred_check
      _
    $region39: #{tpu_custom_call.1} parent=1 // pred_check_branch
      %422 = sbr.rel (0) target = $region41
    $region40: #{tpu_custom_call.1} parent=1 // pred_region
      %423 = dma.done [#allocation5], 16
    $region41: #{tpu_custom_call.1} parent=1 // pred_fallthru
      _
    %424 = sfence
    %425 = vsyncpa [#allocation4], 1
    %426 = vsyncpa [#allocation7], 1
    %427 = vsyncpa [#allocation5], 1

</llo_original>
